<compile_context>
chip_gen: v7x
topology: tpu7x:2x2x1
jax: 0.10.0
libtpu: 0.0.40
codegen_flags: <defaults>
</compile_context>

<pallas_src>
import jax
import jax.numpy as jnp
from jax.experimental import pallas as pl
from jax.experimental.pallas import tpu as pltpu


def _outconv_kernel(x_ref, w_ref, b_ref, o_ref):
    # x_ref: (1, C_in,  TILE_R, 128)  VMEM  - spatial fills sublanes + lanes
    # w_ref: (C_in*C_out,)            SMEM  - flat f32 weights (scalar splat)
    # b_ref: (C_out,)                 SMEM  - flat f32 bias
    # o_ref: (1, C_out, TILE_R, 128)  VMEM  - lane-dense output tile
    c_in = x_ref.shape[1]
    c_out = o_ref.shape[1]

    # Load each input channel tile once; reused for every output channel.
    xs = [x_ref[0, ci].astype(jnp.float32) for ci in range(c_in)]

    for co in range(c_out):  # unrolled at trace time (c_out is tiny)
        # Bias folded into the first FMA: no separate trailing add pass.
        acc = xs[0] * w_ref[co * c_in + 0] + b_ref[co]
        for ci in range(1, c_in):
            acc = acc + xs[ci] * w_ref[co * c_in + ci]
        o_ref[0, co] = acc.astype(o_ref.dtype)


def out_conv3d(x, weight, bias, *, tile_r=1024):
    """1x1x1 Conv3d forward.

    x:      (N, C_in, D, H, W)
    weight: (C_out, C_in, 1, 1, 1)
    bias:   (C_out,)
    returns (N, C_out, D, H, W)
    """
    n, c_in, d, h, w = x.shape
    c_out = weight.shape[0]
    s = d * h * w

    # Flatten spatial and re-block as (rows, 128) so the 128-lane axis is
    # always fully dense.  Pad only when S % 128 != 0 (one extra HBM copy).
    x3 = x.reshape(n, c_in, s)
    s_pad = ((s + 127) // 128) * 128
    if s_pad != s:
        x3 = jnp.pad(x3, ((0, 0), (0, 0), (0, s_pad - s)))
    r = s_pad // 128
    x4 = x3.reshape(n, c_in, r, 128)

    # Flat SMEM scalars: w_flat[co * c_in + ci] = weight[co, ci].
    w_flat = weight.reshape(c_out * c_in).astype(jnp.float32)
    b_flat = bias.reshape(c_out).astype(jnp.float32)

    # ---- spatial row-tile selection -------------------------------------
    itemsize = jnp.dtype(x.dtype).itemsize
    bytes_per_row = (c_in + c_out) * 128 * itemsize      # in + out, per row
    vmem_budget = 12 * 1024 * 1024                       # double-buffered blocks
    max_rows = max(8, (vmem_budget // (2 * bytes_per_row)) // 8 * 8)
    tile_r = min(tile_r, max_rows)
    if n == 1 and r >= 16:
        # Keep >= 2 spatial grid steps so both v7x TensorCores get work.
        half = ((-(-r // 2)) + 7) // 8 * 8
        tile_r = min(tile_r, half)
    if tile_r >= r:
        tile_r = r                                       # single full block
    else:
        tile_r = max(8, (tile_r // 8) * 8)               # (8,128) alignment

    grid = (n, pl.cdiv(r, tile_r))

    # Blocks are capped at <= ~12 MiB double-buffered; 32 MiB is safe on all
    # generations (v7x scoped default 32 MiB, v5e physical 128 MiB).
    vmem_limit = 32 * 1024 * 1024

    out4 = pl.pallas_call(
        _outconv_kernel,
        out_shape=jax.ShapeDtypeStruct((n, c_out, r, 128), x.dtype),
        grid_spec=pltpu.PrefetchScalarGridSpec(
            num_scalar_prefetch=0,
            grid=grid,
            in_specs=[
                pl.BlockSpec((1, c_in, tile_r, 128),
                             lambda ni, si: (ni, 0, si, 0)),
                pl.BlockSpec(memory_space=pltpu.MemorySpace.SMEM),   # weights
                pl.BlockSpec(memory_space=pltpu.MemorySpace.SMEM),   # bias
            ],
            out_specs=pl.BlockSpec((1, c_out, tile_r, 128),
                                   lambda ni, si: (ni, 0, si, 0)),
        ),
        compiler_params=pltpu.CompilerParams(
            dimension_semantics=("parallel", "parallel"),
            vmem_limit_bytes=vmem_limit),
    )(x4, w_flat, b_flat)

    out3 = out4.reshape(n, c_out, s_pad)
    if s_pad != s:
        out3 = out3[:, :, :s]
    return out3.reshape(n, c_out, d, h, w)


if __name__ == "__main__":
    # Small shapes consistent with OutConv3D: N=2, C_in=4, C_out=3, D=H=W=8.
    key = jax.random.PRNGKey(0)
    kx, kw, kb = jax.random.split(key, 3)

    N, C_IN, C_OUT, D, H, W = 2, 4, 3, 8, 8, 8
    x = jax.random.normal(kx, (N, C_IN, D, H, W), dtype=jnp.float32)

    # Deterministic PyTorch-style uniform init for Conv3d with kernel_size=1.
    bound = 1.0 / (C_IN ** 0.5)
    weight = jax.random.uniform(kw, (C_OUT, C_IN, 1, 1, 1),
                                minval=-bound, maxval=bound, dtype=jnp.float32)
    bias = jax.random.uniform(kb, (C_OUT,),
                              minval=-bound, maxval=bound, dtype=jnp.float32)

    out = jax.jit(out_conv3d)(x, weight, bias)
    jax.block_until_ready(out)

    # Sanity check against a pure-JAX reference (1x1x1 conv == einsum + bias).
    ref = jnp.einsum('ncdhw,oc->nodhw', x, weight.reshape(C_OUT, C_IN)) \
          + bias[None, :, None, None, None]
    assert out.shape == (N, C_OUT, D, H, W)
    assert jnp.allclose(out, ref, atol=1e-5, rtol=1e-5)

    print("KERNEL_OK")
</pallas_src>

<mosaic_0001>
module attributes {stable_mosaic.version = 11 : i64} {
  func.func @_outconv_kernel(%arg0: i32, %arg1: i32, %arg2: memref<1x4x4x128xf32, #tpu.memory_space<vmem>>, %arg3: memref<12xf32, #tpu.memory_space<smem>>, %arg4: memref<3xf32, #tpu.memory_space<smem>>, %arg5: memref<1x3x4x128xf32, #tpu.memory_space<vmem>>) attributes {dimension_semantics = [#tpu.dimension_semantics<parallel>, #tpu.dimension_semantics<parallel>], iteration_bounds = array<i64: 2, 1>, scalar_prefetch = 0 : i64, scratch_operands = 0 : i64, tpu.core_type = #tpu.core_type<tc>, window_params = [{transform_indices = @transform_0, window_bounds = array<i64: 1, 4, 4, 128>}, {transform_indices = @transform_1, window_bounds = array<i64: 12>}, {transform_indices = @transform_2, window_bounds = array<i64: 3>}, {transform_indices = @transform_3, window_bounds = array<i64: 1, 3, 4, 128>}]} {
    %c0 = arith.constant 0 : index
    %c0_0 = arith.constant 0 : index
    %c0_1 = arith.constant 0 : index
    %c0_2 = arith.constant 0 : index
    %0 = vector.load %arg2[%c0, %c0_0, %c0_1, %c0_2] : memref<1x4x4x128xf32, #tpu.memory_space<vmem>>, vector<1x1x4x128xf32>
    %1 = vector.shape_cast %0 : vector<1x1x4x128xf32> to vector<4x128xf32>
    %c0_3 = arith.constant 0 : index
    %c1 = arith.constant 1 : index
    %c0_4 = arith.constant 0 : index
    %c0_5 = arith.constant 0 : index
    %2 = vector.load %arg2[%c0_3, %c1, %c0_4, %c0_5] : memref<1x4x4x128xf32, #tpu.memory_space<vmem>>, vector<1x1x4x128xf32>
    %3 = vector.shape_cast %2 : vector<1x1x4x128xf32> to vector<4x128xf32>
    %c0_6 = arith.constant 0 : index
    %c2 = arith.constant 2 : index
    %c0_7 = arith.constant 0 : index
    %c0_8 = arith.constant 0 : index
    %4 = vector.load %arg2[%c0_6, %c2, %c0_7, %c0_8] : memref<1x4x4x128xf32, #tpu.memory_space<vmem>>, vector<1x1x4x128xf32>
    %5 = vector.shape_cast %4 : vector<1x1x4x128xf32> to vector<4x128xf32>
    %c0_9 = arith.constant 0 : index
    %c3 = arith.constant 3 : index
    %c0_10 = arith.constant 0 : index
    %c0_11 = arith.constant 0 : index
    %6 = vector.load %arg2[%c0_9, %c3, %c0_10, %c0_11] : memref<1x4x4x128xf32, #tpu.memory_space<vmem>>, vector<1x1x4x128xf32>
    %7 = vector.shape_cast %6 : vector<1x1x4x128xf32> to vector<4x128xf32>
    %c0_12 = arith.constant 0 : index
    %8 = memref.load %arg3[%c0_12] : memref<12xf32, #tpu.memory_space<smem>>
    %9 = vector.broadcast %8 : f32 to vector<4x128xf32>
    %10 = arith.mulf %1, %9 : vector<4x128xf32>
    %c0_13 = arith.constant 0 : index
    %11 = memref.load %arg4[%c0_13] : memref<3xf32, #tpu.memory_space<smem>>
    %12 = vector.broadcast %11 : f32 to vector<4x128xf32>
    %13 = arith.addf %10, %12 : vector<4x128xf32>
    %c1_14 = arith.constant 1 : index
    %14 = memref.load %arg3[%c1_14] : memref<12xf32, #tpu.memory_space<smem>>
    %15 = vector.broadcast %14 : f32 to vector<4x128xf32>
    %16 = arith.mulf %3, %15 : vector<4x128xf32>
    %17 = arith.addf %13, %16 : vector<4x128xf32>
    %c2_15 = arith.constant 2 : index
    %18 = memref.load %arg3[%c2_15] : memref<12xf32, #tpu.memory_space<smem>>
    %19 = vector.broadcast %18 : f32 to vector<4x128xf32>
    %20 = arith.mulf %5, %19 : vector<4x128xf32>
    %21 = arith.addf %17, %20 : vector<4x128xf32>
    %c3_16 = arith.constant 3 : index
    %22 = memref.load %arg3[%c3_16] : memref<12xf32, #tpu.memory_space<smem>>
    %23 = vector.broadcast %22 : f32 to vector<4x128xf32>
    %24 = arith.mulf %7, %23 : vector<4x128xf32>
    %25 = arith.addf %21, %24 : vector<4x128xf32>
    %c0_17 = arith.constant 0 : index
    %c0_18 = arith.constant 0 : index
    %c0_19 = arith.constant 0 : index
    %c0_20 = arith.constant 0 : index
    %26 = vector.load %arg5[%c0_17, %c0_18, %c0_19, %c0_20] : memref<1x3x4x128xf32, #tpu.memory_space<vmem>>, vector<1x1x4x128xf32>
    %27 = vector.shape_cast %26 : vector<1x1x4x128xf32> to vector<4x128xf32>
    %28 = vector.shape_cast %25 : vector<4x128xf32> to vector<1x1x4x128xf32>
    tpu.vector_store %arg5[%c0_17, %c0_18, %c0_19, %c0_20], %28 {strides = array<i32>} : memref<1x3x4x128xf32, #tpu.memory_space<vmem>>, vector<1x1x4x128xf32>,
    %c4 = arith.constant 4 : index
    %29 = memref.load %arg3[%c4] : memref<12xf32, #tpu.memory_space<smem>>
    %30 = vector.broadcast %29 : f32 to vector<4x128xf32>
    %31 = arith.mulf %1, %30 : vector<4x128xf32>
    %c1_21 = arith.constant 1 : index
    %32 = memref.load %arg4[%c1_21] : memref<3xf32, #tpu.memory_space<smem>>
    %33 = vector.broadcast %32 : f32 to vector<4x128xf32>
    %34 = arith.addf %31, %33 : vector<4x128xf32>
    %c5 = arith.constant 5 : index
    %35 = memref.load %arg3[%c5] : memref<12xf32, #tpu.memory_space<smem>>
    %36 = vector.broadcast %35 : f32 to vector<4x128xf32>
    %37 = arith.mulf %3, %36 : vector<4x128xf32>
    %38 = arith.addf %34, %37 : vector<4x128xf32>
    %c6 = arith.constant 6 : index
    %39 = memref.load %arg3[%c6] : memref<12xf32, #tpu.memory_space<smem>>
    %40 = vector.broadcast %39 : f32 to vector<4x128xf32>
    %41 = arith.mulf %5, %40 : vector<4x128xf32>
    %42 = arith.addf %38, %41 : vector<4x128xf32>
    %c7 = arith.constant 7 : index
    %43 = memref.load %arg3[%c7] : memref<12xf32, #tpu.memory_space<smem>>
    %44 = vector.broadcast %43 : f32 to vector<4x128xf32>
    %45 = arith.mulf %7, %44 : vector<4x128xf32>
    %46 = arith.addf %42, %45 : vector<4x128xf32>
    %c0_22 = arith.constant 0 : index
    %c1_23 = arith.constant 1 : index
    %c0_24 = arith.constant 0 : index
    %c0_25 = arith.constant 0 : index
    %47 = vector.load %arg5[%c0_22, %c1_23, %c0_24, %c0_25] : memref<1x3x4x128xf32, #tpu.memory_space<vmem>>, vector<1x1x4x128xf32>
    %48 = vector.shape_cast %47 : vector<1x1x4x128xf32> to vector<4x128xf32>
    %49 = vector.shape_cast %46 : vector<4x128xf32> to vector<1x1x4x128xf32>
    tpu.vector_store %arg5[%c0_22, %c1_23, %c0_24, %c0_25], %49 {strides = array<i32>} : memref<1x3x4x128xf32, #tpu.memory_space<vmem>>, vector<1x1x4x128xf32>,
    %c8 = arith.constant 8 : index
    %50 = memref.load %arg3[%c8] : memref<12xf32, #tpu.memory_space<smem>>
    %51 = vector.broadcast %50 : f32 to vector<4x128xf32>
    %52 = arith.mulf %1, %51 : vector<4x128xf32>
    %c2_26 = arith.constant 2 : index
    %53 = memref.load %arg4[%c2_26] : memref<3xf32, #tpu.memory_space<smem>>
    %54 = vector.broadcast %53 : f32 to vector<4x128xf32>
    %55 = arith.addf %52, %54 : vector<4x128xf32>
    %c9 = arith.constant 9 : index
    %56 = memref.load %arg3[%c9] : memref<12xf32, #tpu.memory_space<smem>>
    %57 = vector.broadcast %56 : f32 to vector<4x128xf32>
    %58 = arith.mulf %3, %57 : vector<4x128xf32>
    %59 = arith.addf %55, %58 : vector<4x128xf32>
    %c10 = arith.constant 10 : index
    %60 = memref.load %arg3[%c10] : memref<12xf32, #tpu.memory_space<smem>>
    %61 = vector.broadcast %60 : f32 to vector<4x128xf32>
    %62 = arith.mulf %5, %61 : vector<4x128xf32>
    %63 = arith.addf %59, %62 : vector<4x128xf32>
    %c11 = arith.constant 11 : index
    %64 = memref.load %arg3[%c11] : memref<12xf32, #tpu.memory_space<smem>>
    %65 = vector.broadcast %64 : f32 to vector<4x128xf32>
    %66 = arith.mulf %7, %65 : vector<4x128xf32>
    %67 = arith.addf %63, %66 : vector<4x128xf32>
    %c0_27 = arith.constant 0 : index
    %c2_28 = arith.constant 2 : index
    %c0_29 = arith.constant 0 : index
    %c0_30 = arith.constant 0 : index
    %68 = vector.load %arg5[%c0_27, %c2_28, %c0_29, %c0_30] : memref<1x3x4x128xf32, #tpu.memory_space<vmem>>, vector<1x1x4x128xf32>
    %69 = vector.shape_cast %68 : vector<1x1x4x128xf32> to vector<4x128xf32>
    %70 = vector.shape_cast %67 : vector<4x128xf32> to vector<1x1x4x128xf32>
    tpu.vector_store %arg5[%c0_27, %c2_28, %c0_29, %c0_30], %70 {strides = array<i32>} : memref<1x3x4x128xf32, #tpu.memory_space<vmem>>, vector<1x1x4x128xf32>,
    return
  }
  func.func @transform_0(%arg0: i32, %arg1: i32) -> (i32, i32, i32, i32) {
    %c0_i32 = arith.constant 0 : i32
    %c0_i32_0 = arith.constant 0 : i32
    %c0_i32_1 = arith.constant 0 : i32
    return %arg0, %c0_i32, %arg1, %c0_i32_0 : i32, i32, i32, i32
  }
  func.func @transform_1(%arg0: i32, %arg1: i32) -> i32 {
    %c0_i32 = arith.constant 0 : i32
    %c0_i32_0 = arith.constant 0 : i32
    return %c0_i32 : i32
  }
  func.func @transform_2(%arg0: i32, %arg1: i32) -> i32 {
    %c0_i32 = arith.constant 0 : i32
    %c0_i32_0 = arith.constant 0 : i32
    return %c0_i32 : i32
  }
  func.func @transform_3(%arg0: i32, %arg1: i32) -> (i32, i32, i32, i32) {
    %c0_i32 = arith.constant 0 : i32
    %c0_i32_0 = arith.constant 0 : i32
    %c0_i32_1 = arith.constant 0 : i32
    return %arg0, %c0_i32, %arg1, %c0_i32_0 : i32, i32, i32, i32
  }
}

</mosaic_0001>

<llo_original>
// kernel: out_conv3d.1
$region0: #{out_conv3d.1}
  #allocation0 [shape = 'u32[]', space=smem, size = 0x4, offset = 0x4, fixed_abs, tag = 'smem constant byte address 0x4 - core index']
  #allocation1 [shape = 'u32[144,128]{1,0:T(1,128)}', space=vmem, size = 0x12000, scoped, tag = 'internal scratch']
  %s0 = inlined_call_operand.vmem [shape: f32[2,4,4,128], index: 0, kind: input, shape index: {}]
  %s1 = inlined_call_operand.vmem [shape: f32[12], index: 1, kind: input, shape index: {}]
  %s2 = inlined_call_operand.vmem [shape: f32[3], index: 2, kind: input, shape index: {}]
  %s3 = inlined_call_operand.vmem [shape: f32[2,3,4,128], index: 3, kind: output, shape index: {}]
  %s4 = sld [smem:[#allocation0]]
  $region53: #{out_conv3d.1} parent=0
    _
  %s6 = ssub.s32 1, %s4
  %s7 = scalar_select 0, %s6, %s4
  $region1: #{out_conv3d.1} parent=0
    #allocation2 [shape = 'u8[512]{0}', space=smem, size = 0x200, scoped, tag = 'input window, operand 1, single buffered']
    #allocation3 [shape = 's32[2]{0}', space=sflag, size = 0x8, scoped, tag = 'scoped memory for out_conv3d.1']
    #allocation4 [shape = 'u8[512]{0}', space=smem, size = 0x200, scoped, tag = 'input window, operand 2, single buffered']
    #allocation5 [shape = 's32[1]{0}', space=sflag, size = 0x4, scoped, tag = 'scoped memory for out_conv3d.1']
    %8 = vsyncpa [#allocation3], 0
    %9 = vsyncpa [#allocation5], 0
    loop: start=0, step=1, limit=4
    $region2: #{out_conv3d.1} parent=1 // loop_pre_header
      _
    $region3: #{out_conv3d.1} parent=1 // loop_header
      %s11 = sphi 0, %s15
      %p12 = scmp.ge.s32.totalorder %s11, 4
      %s18 = sphi 0, %s30
      %s19 = sphi 0, %s26
      %s20 = sphi 0, %s18
      %s21 = sphi 0, %s19
      %s22 = sphi 0, %s20
      %s23 = sphi 0, %s21
      %s35 = sphi 0, %s37
      %s38 = sphi 0, %s35
      %s39 = sphi 0, %s38
      %s55 = sphi 0, %s39
      %s59 = sphi 0, %s59
      %s61 = sphi 0, %s59
      %s62 = sphi 0, %s61
      %s76 = sphi 0, %s62
      %s80 = sphi 0, %s80
      %s82 = sphi 0, %s80
      %s83 = sphi 0, %s82
      %s97 = sphi 0, %s83
      %s105 = sphi 0, %s107
      %s108 = sphi 0, %s105
      %s109 = sphi 0, %s108
      %s125 = sphi 0, %s109
    $region4: #{out_conv3d.1} parent=1 // loop_header_branch
      %14 = sbr.rel (%p12) target = $region8
    $region5: #{out_conv3d.1} parent=1 // loop_body
      %s16 = ssub.s32 %s11, 1
      %s17 = ssub.s32 %s11, 2
      %s24 = sadd.s32 1, %s19
      %p25 = scmp.ge.s32.totalorder %s24, 1
      %s26 = scalar_select %p25, 0, %s24
      %s27 = sadd.s32 1, %s18
      %s28 = scalar_select %p25, %s27, %s18
      %p29 = scmp.ge.s32.totalorder %s28, 2
      %s30 = scalar_select %p29, 0, %s28
      %s31 = ssub.s32 %s18, %s30
      %s32 = ssub.s32 %s19, %s26
      %s33 = sor.u32 %s31, %s32
      %p34 = scmp.eq.s32.totalorder %s33, 0
      %s36 = sadd.s32 %s35, 1
      %s37 = scalar_select %p34, %s35, %s36
      %p40 = pneg %p34
      %p41 = scmp.eq.s32.totalorder %s11, 1
      %p42 = por %p40, %p41
      %p43 = scmp.ne.s32.totalorder %s35, %s38
      %p44 = scmp.eq.s32.totalorder %s11, 0
      %p45 = por %p43, %p44
      %p46 = scmp.ne.s32.totalorder %s35, %s38
      %p47 = scmp.eq.s32.totalorder %s16, 1
      %p48 = por %p46, %p47
      %p49 = scmp.ne.s32.totalorder %s38, %s39
      %p50 = scmp.eq.s32.totalorder %s16, 0
      %p51 = por %p49, %p50
      %p52 = scmp.ne.s32.totalorder %s38, %s39
      %p53 = scmp.eq.s32.totalorder %s17, 1
      %p54 = por %p52, %p53
      %p56 = scmp.ne.s32.totalorder %s39, %s55
      %p57 = scmp.eq.s32.totalorder %s17, 0
      %p58 = por %p56, %p57
      %s60 = sadd.s32 %s59, 1
      %p63 = scmp.eq.s32.totalorder %s11, 1
      %p64 = scmp.ne.s32.totalorder %s59, %s61
      %p65 = scmp.eq.s32.totalorder %s11, 0
      %p66 = por %p64, %p65
      %p67 = scmp.ne.s32.totalorder %s59, %s61
      %p68 = scmp.eq.s32.totalorder %s16, 1
      %p69 = por %p67, %p68
      %p70 = scmp.ne.s32.totalorder %s61, %s62
      %p71 = scmp.eq.s32.totalorder %s16, 0
      %p72 = por %p70, %p71
      %p73 = scmp.ne.s32.totalorder %s61, %s62
      %p74 = scmp.eq.s32.totalorder %s17, 1
      %p75 = por %p73, %p74
      %p77 = scmp.ne.s32.totalorder %s62, %s76
      %p78 = scmp.eq.s32.totalorder %s17, 0
      %p79 = por %p77, %p78
      %s81 = sadd.s32 %s80, 1
      %p84 = scmp.eq.s32.totalorder %s11, 1
      %p85 = scmp.ne.s32.totalorder %s80, %s82
      %p86 = scmp.eq.s32.totalorder %s11, 0
      %p87 = por %p85, %p86
      %p88 = scmp.ne.s32.totalorder %s80, %s82
      %p89 = scmp.eq.s32.totalorder %s16, 1
      %p90 = por %p88, %p89
      %p91 = scmp.ne.s32.totalorder %s82, %s83
      %p92 = scmp.eq.s32.totalorder %s16, 0
      %p93 = por %p91, %p92
      %p94 = scmp.ne.s32.totalorder %s82, %s83
      %p95 = scmp.eq.s32.totalorder %s17, 1
      %p96 = por %p94, %p95
      %p98 = scmp.ne.s32.totalorder %s83, %s97
      %p99 = scmp.eq.s32.totalorder %s17, 0
      %p100 = por %p98, %p99
      %s101 = ssub.s32 %s18, %s30
      %s102 = ssub.s32 %s19, %s26
      %s103 = sor.u32 %s101, %s102
      %p104 = scmp.eq.s32.totalorder %s103, 0
      %s106 = sadd.s32 %s105, 1
      %s107 = scalar_select %p104, %s105, %s106
      %p110 = pneg %p104
      %p111 = scmp.eq.s32.totalorder %s11, 1
      %p112 = por %p110, %p111
      %p113 = scmp.ne.s32.totalorder %s105, %s108
      %p114 = scmp.eq.s32.totalorder %s11, 0
      %p115 = por %p113, %p114
      %p116 = scmp.ne.s32.totalorder %s105, %s108
      %p117 = scmp.eq.s32.totalorder %s16, 1
      %p118 = por %p116, %p117
      %p119 = scmp.ne.s32.totalorder %s108, %s109
      %p120 = scmp.eq.s32.totalorder %s16, 0
      %p121 = por %p119, %p120
      %p122 = scmp.ne.s32.totalorder %s108, %s109
      %p123 = scmp.eq.s32.totalorder %s17, 1
      %p124 = por %p122, %p123
      %p126 = scmp.ne.s32.totalorder %s109, %s125
      %p127 = scmp.eq.s32.totalorder %s17, 0
      %p128 = por %p126, %p127
      %p129 = scmp.le.s32.totalorder 1, %s11
      %p130 = scmp.lt.s32.totalorder %s11, 3
      %p131 = pnand %p129, %p130
      %p132 = pneg %p131
      // Predicated region
      $region9: #{out_conv3d.1} parent=5 // pred_check
        _
      $region10: #{out_conv3d.1} parent=5 // pred_check_branch
        %134 = sbr.rel (%p131) target = $region12
      $region11: #{out_conv3d.1} parent=5 // pred_region
        %s135 = ssub.s32 %s11, 1
        // Predicated region
        $region13: #{out_conv3d.1} parent=11 // pred_check
          %p136 = pneg %p72
        $region14: #{out_conv3d.1} parent=11 // pred_check_branch
          %138 = sbr.rel (%p136) target = $region16
        $region15: #{out_conv3d.1} parent=11 // pred_region
          %s140 = ssub.s32 16, 16
          %141 = vsyncadd [#allocation3], %s140
          %s143 = sshll.u32 %s1, 4
          %s144 = int_to_ptr.vmem [resolvable:$true] %s143
          %146 = dma.vmem_to_smem %s144, 16, [#allocation2], [#allocation3]
        $region16: #{out_conv3d.1} parent=11 // pred_fallthru
          _
        // Predicated region
        $region17: #{out_conv3d.1} parent=11 // pred_check
          %p147 = pneg %p93
        $region18: #{out_conv3d.1} parent=11 // pred_check_branch
          %149 = sbr.rel (%p147) target = $region20
        $region19: #{out_conv3d.1} parent=11 // pred_region
          %s151 = ssub.s32 16, 16
          %152 = vsyncadd [#allocation5], %s151
          %s154 = sshll.u32 %s2, 4
          %s155 = int_to_ptr.vmem [resolvable:$true] %s154
          %157 = dma.vmem_to_smem %s155, 16, [#allocation4], [#allocation5]
        $region20: #{out_conv3d.1} parent=11 // pred_fallthru
          _
      $region12: #{out_conv3d.1} parent=5 // pred_fallthru
        _
      %p158 = scmp.lt.s32.totalorder %s11, 2
      // Predicated region
      $region21: #{out_conv3d.1} parent=5 // pred_check
        %p159 = pneg %p158
      $region22: #{out_conv3d.1} parent=5 // pred_check_branch
        %161 = sbr.rel (%p159) target = $region24
      $region23: #{out_conv3d.1} parent=5 // pred_region
        // Predicated region
        $region25: #{out_conv3d.1} parent=23 // pred_check
          %p162 = pneg %p45
        $region26: #{out_conv3d.1} parent=23 // pred_check_branch
          %164 = sbr.rel (%p162) target = $region28
        $region27: #{out_conv3d.1} parent=23 // pred_region
          %p165 = scmp.lt.s32.totalorder %s18, 1
          %s166 = scalar_select %p165, %s18, 1
          %p167 = scmp.lt.s32.totalorder %s19, 0
          %s168 = scalar_select %p167, %s19, 0
          %s169 = smul.addr %s166, 4
          %s170 = sadd.s32 %s168, %s169
          %s171 = smul.addr %s170, 4
          %s172 = scalar_lea.vmem %s0, %s171
        $region28: #{out_conv3d.1} parent=23 // pred_fallthru
          _
      $region24: #{out_conv3d.1} parent=5 // pred_fallthru
        _
      %p173 = scmp.le.s32.totalorder 1, %s11
      %p174 = scmp.lt.s32.totalorder %s11, 3
      %p175 = pnand %p173, %p174
      %p176 = pneg %p175
      // Predicated region
      $region29: #{out_conv3d.1} parent=5 // pred_check
        _
      $region30: #{out_conv3d.1} parent=5 // pred_check_branch
        %178 = sbr.rel (%p175) target = $region32
      $region31: #{out_conv3d.1} parent=5 // pred_region
        %s179 = ssub.s32 %s11, 1
        // Predicated region
        $region33: #{out_conv3d.1} parent=31 // pred_check
          %p180 = pneg %p72
        $region34: #{out_conv3d.1} parent=31 // pred_check_branch
          %182 = sbr.rel (%p180) target = $region36
        $region35: #{out_conv3d.1} parent=31 // pred_region
          %183 = dma.done [#allocation3], 16
        $region36: #{out_conv3d.1} parent=31 // pred_fallthru
          _
        // Predicated region
        $region37: #{out_conv3d.1} parent=31 // pred_check
          %p184 = pneg %p93
        $region38: #{out_conv3d.1} parent=31 // pred_check_branch
          %186 = sbr.rel (%p184) target = $region40
        $region39: #{out_conv3d.1} parent=31 // pred_region
          %187 = dma.done [#allocation5], 16
        $region40: #{out_conv3d.1} parent=31 // pred_fallthru
          _
        %188 = sfence
        %p189 = scmp.lt.s32.totalorder %s20, 1
        %s190 = scalar_select %p189, %s20, 1
        %p191 = scmp.lt.s32.totalorder %s21, 0
        %s192 = scalar_select %p191, %s21, 0
        %s193 = smul.addr %s190, 4
        %s194 = sadd.s32 %s192, %s193
        %s195 = smul.addr %s194, 4
        %s196 = scalar_lea.vmem %s0, %s195
        %p197 = pneg %p51
        %p198 = pneg %p48
        %p199 = pneg %p72
        %p200 = pneg %p69
        %p201 = pneg %p93
        %p202 = pneg %p90
        %p203 = pneg %p121
        %p204 = pneg %p118
        %p205 = scmp.lt.s32.totalorder %s20, 1
        %s206 = scalar_select %p205, %s20, 1
        %p207 = scmp.lt.s32.totalorder %s21, 0
        %s208 = scalar_select %p207, %s21, 0
        %s209 = smul.addr %s206, 3
        %s210 = sadd.s32 %s208, %s209
        %s211 = smul.addr %s210, 4
        %s212 = scalar_lea.vmem %s3, %s211
        %p213 = scmp.lt.s32.totalorder %s20, 1
        %s214 = scalar_select %p213, %s20, 1
        %p215 = scmp.lt.s32.totalorder %s21, 0
        %s216 = scalar_select %p215, %s21, 0
        %s217 = smul.addr %s214, 4
        %s218 = sadd.s32 %s216, %s217
        %s219 = smul.addr %s218, 4
        %s220 = scalar_lea.vmem %s0, %s219
        %p221 = scmp.lt.s32.totalorder %s20, 1
        %s222 = scalar_select %p221, %s20, 1
        %p223 = scmp.lt.s32.totalorder %s21, 0
        %s224 = scalar_select %p223, %s21, 0
        %s225 = smul.addr %s222, 3
        %s226 = sadd.s32 %s224, %s225
        %s227 = smul.addr %s226, 4
        %s228 = scalar_lea.vmem %s3, %s227
        %v229 = vld [vmem:[%s220] sm:$0xf]
        %s230 = scalar_lea.vmem %s220, 4
        %v231 = vld [vmem:[%s230] sm:$0xf]
        %s232 = scalar_lea.vmem %s220, 8
        %v233 = vld [vmem:[%s232] sm:$0xf]
        %s234 = scalar_lea.vmem %s220, 12
        %v235 = vld [vmem:[%s234] sm:$0xf]
        %s236 = sld [smem:[#allocation2]]
        %v237 = vstv %s236
        %v238 = vmul.f32 %v229, %v237
        %s239 = sld [smem:[#allocation4]]
        %v240 = vstv %s239
        %v241 = vadd.f32 %v238, %v240
        %s242 = sld [smem:[#allocation2 + $0x1]]
        %v243 = vstv %s242
        %v244 = vmul.f32 %v231, %v243
        %v245 = vadd.f32 %v241, %v244
        %s246 = sld [smem:[#allocation2 + $0x2]]
        %v247 = vstv %s246
        %v248 = vmul.f32 %v233, %v247
        %v249 = vadd.f32 %v245, %v248
        %s250 = sld [smem:[#allocation2 + $0x3]]
        %v251 = vstv %s250
        %v252 = vmul.f32 %v235, %v251
        %v253 = vadd.f32 %v249, %v252
        %254 = vst [vmem:[%s228] sm:$0xf] %v253
        %s255 = sld [smem:[#allocation2 + $0x4]]
        %v256 = vstv %s255
        %v257 = vmul.f32 %v229, %v256
        %s258 = sld [smem:[#allocation4 + $0x1]]
        %v259 = vstv %s258
        %v260 = vadd.f32 %v257, %v259
        %s261 = sld [smem:[#allocation2 + $0x5]]
        %v262 = vstv %s261
        %v263 = vmul.f32 %v231, %v262
        %v264 = vadd.f32 %v260, %v263
        %s265 = sld [smem:[#allocation2 + $0x6]]
        %v266 = vstv %s265
        %v267 = vmul.f32 %v233, %v266
        %v268 = vadd.f32 %v264, %v267
        %s269 = sld [smem:[#allocation2 + $0x7]]
        %v270 = vstv %s269
        %v271 = vmul.f32 %v235, %v270
        %v272 = vadd.f32 %v268, %v271
        %s273 = scalar_lea.vmem %s228, 4
        %274 = vst [vmem:[%s273] sm:$0xf] %v272
        %s275 = sld [smem:[#allocation2 + $0x8]]
        %v276 = vstv %s275
        %v277 = vmul.f32 %v229, %v276
        %s278 = sld [smem:[#allocation4 + $0x2]]
        %v279 = vstv %s278
        %v280 = vadd.f32 %v277, %v279
        %s281 = sld [smem:[#allocation2 + $0x9]]
        %v282 = vstv %s281
        %v283 = vmul.f32 %v231, %v282
        %v284 = vadd.f32 %v280, %v283
        %s285 = sld [smem:[#allocation2 + $0xa]]
        %v286 = vstv %s285
        %v287 = vmul.f32 %v233, %v286
        %v288 = vadd.f32 %v284, %v287
        %s289 = sld [smem:[#allocation2 + $0xb]]
        %v290 = vstv %s289
        %v291 = vmul.f32 %v235, %v290
        %v292 = vadd.f32 %v288, %v291
        %s293 = scalar_lea.vmem %s228, 8
        %294 = vst [vmem:[%s293] sm:$0xf] %v292
        %p295 = scmp.lt.s32.totalorder %s20, 1
        %s296 = scalar_select %p295, %s20, 1
        %p297 = scmp.lt.s32.totalorder %s21, 0
        %s298 = scalar_select %p297, %s21, 0
        %s299 = smul.addr %s296, 3
        %s300 = sadd.s32 %s298, %s299
        %s301 = smul.addr %s300, 4
        %s302 = scalar_lea.vmem %s3, %s301
        // Predicated region
        $region41: #{out_conv3d.1} parent=31 // pred_check
          %p303 = pneg %p118
        $region42: #{out_conv3d.1} parent=31 // pred_check_branch
          %305 = sbr.rel (%p303) target = $region44
        $region43: #{out_conv3d.1} parent=31 // pred_region
          _
        $region44: #{out_conv3d.1} parent=31 // pred_fallthru
          _
      $region32: #{out_conv3d.1} parent=5 // pred_fallthru
        _
      %p306 = scmp.le.s32.totalorder 2, %s11
      // Predicated region
      $region45: #{out_conv3d.1} parent=5 // pred_check
        %p307 = pneg %p306
      $region46: #{out_conv3d.1} parent=5 // pred_check_branch
        %309 = sbr.rel (%p307) target = $region48
      $region47: #{out_conv3d.1} parent=5 // pred_region
        %s310 = ssub.s32 %s11, 2
        // Predicated region
        $region49: #{out_conv3d.1} parent=47 // pred_check
          %p311 = pneg %p124
        $region50: #{out_conv3d.1} parent=47 // pred_check_branch
          %313 = sbr.rel (%p311) target = $region52
        $region51: #{out_conv3d.1} parent=47 // pred_region
          %p314 = scmp.lt.s32.totalorder %s22, 1
          %s315 = scalar_select %p314, %s22, 1
          %p316 = scmp.lt.s32.totalorder %s23, 0
          %s317 = scalar_select %p316, %s23, 0
          %s318 = smul.addr %s315, 3
          %s319 = sadd.s32 %s317, %s318
          %s320 = smul.addr %s319, 4
          %s321 = scalar_lea.vmem %s3, %s320
        $region52: #{out_conv3d.1} parent=47 // pred_fallthru
          _
      $region48: #{out_conv3d.1} parent=5 // pred_fallthru
        _
    $region6: #{out_conv3d.1} parent=1 // loop_footer
      %s15 = sadd.s32 1, %s11
    $region7: #{out_conv3d.1} parent=1 // loop_footer_branch
      %10 = sbr.rel target = $region3
    $region8: #{out_conv3d.1} parent=1 // loop_exit
      _
    %322 = vsyncpa [#allocation3], 1
    %s323 = scalar_lea.sflag [#allocation3], 1
    %324 = vsyncpa %s323, 1
    %325 = vsyncpa [#allocation5], 1

</llo_original>
